<compile_context>
chip_gen: v7x
topology: tpu7x:2x2x1
jax: 0.10.0
libtpu: 0.0.40
codegen_flags: <defaults>
</compile_context>

<pallas_src>
import functools

import jax
import jax.numpy as jnp
from jax.experimental import pallas as pl
from jax.experimental.pallas import tpu as pltpu


def actor_kernel(x_ref, w1_ref, b1_ref, w2_ref, b2_ref, o_ref):
    """One batch tile: (x @ W1 + b1) -> ReLU -> (@ W2 + b2) -> softmax(axis=-1)."""
    x = x_ref[...]                                                        # [TB, S]
    # NOTE: casting x/W to bf16 here (keeping preferred_element_type=f32) halves DMA
    # bytes and uses the MXU's native input width, but only matters once S/H grow; at
    # CartPole dims it just loosens the numerics, so we keep f32 inputs.
    h = jnp.dot(x, w1_ref[...], preferred_element_type=jnp.float32)       # [TB, H]
    h = jnp.maximum(h + b1_ref[...], 0.0)                                 # bias + ReLU
    logits = jnp.dot(h, w2_ref[...], preferred_element_type=jnp.float32)  # [TB, A]
    logits = logits + b2_ref[...]
    # Numerically stable softmax along the last axis (matches F.softmax(dim=-1)).
    m = jnp.max(logits, axis=-1, keepdims=True)
    e = jnp.exp(logits - m)
    denom = jnp.sum(e, axis=-1, keepdims=True)
    # Exact reciprocal keeps sum(probs) == 1 to <1e-6; approx=True would be ~1e-4 off.
    o_ref[...] = (e * pl.reciprocal(denom, approx=False)).astype(o_ref.dtype)


@functools.partial(jax.jit, static_argnames=("batch_tile",))
def actor_forward(state, w1, b1, w2, b2, *, batch_tile=512):
    """state: [B, state_dim] f32; returns softmax probs [B, action_dim] f32.

    For B <= batch_tile everything fits trivially in VMEM: use a gridless pallas_call
    (no per-grid-step overhead, no pipeline prologue/epilogue). For larger B, tile only
    the batch axis and keep the weights resident in VMEM across all grid steps.
    """
    B, S = state.shape
    H = w1.shape[1]
    A = w2.shape[1]
    out_shape = jax.ShapeDtypeStruct((B, A), jnp.float32)

    if B <= batch_tile:
        # Gridless: full arrays are copied into VMEM once; a single kernel invocation.
        return pl.pallas_call(actor_kernel, out_shape=out_shape)(state, w1, b1, w2, b2)

    # Batch-tiled path. Pad B up to a multiple of the tile so every block is full
    # (padded rows are independent under row-wise softmax and sliced away below).
    tb = batch_tile
    num_tiles = pl.cdiv(B, tb)
    b_pad = num_tiles * tb
    if b_pad != B:
        state = jnp.pad(state, ((0, b_pad - B), (0, 0)))

    out = pl.pallas_call(
        actor_kernel,
        out_shape=jax.ShapeDtypeStruct((b_pad, A), jnp.float32),
        grid=(num_tiles,),
        in_specs=[
            pl.BlockSpec((tb, S), lambda i: (i, 0)),   # stream batch tiles
            pl.BlockSpec((S, H), lambda i: (0, 0)),    # weights resident across steps
            pl.BlockSpec((1, H), lambda i: (0, 0)),
            pl.BlockSpec((H, A), lambda i: (0, 0)),
            pl.BlockSpec((1, A), lambda i: (0, 0)),
        ],
        out_specs=pl.BlockSpec((tb, A), lambda i: (i, 0)),
        compiler_params=pltpu.CompilerParams(
            # Batch tiles are independent -> "parallel" lets v7x's 2 TCs split them.
            dimension_semantics=("parallel",),
        ),
    )(state, w1, b1, w2, b2)
    return out[:B] if b_pad != B else out


def init_actor_params(key, state_dim, action_dim, hidden_dim):
    """Deterministic init mimicking nn.Linear's U(-1/sqrt(fan_in), 1/sqrt(fan_in))."""
    k1, k2, k3, k4 = jax.random.split(key, 4)
    bound1 = 1.0 / jnp.sqrt(jnp.float32(state_dim))
    bound2 = 1.0 / jnp.sqrt(jnp.float32(hidden_dim))
    # Stored as [in, out] (transposed vs PyTorch) — see layout comment at top.
    w1 = jax.random.uniform(k1, (state_dim, hidden_dim), jnp.float32, -bound1, bound1)
    b1 = jax.random.uniform(k2, (1, hidden_dim), jnp.float32, -bound1, bound1)
    w2 = jax.random.uniform(k3, (hidden_dim, action_dim), jnp.float32, -bound2, bound2)
    b2 = jax.random.uniform(k4, (1, action_dim), jnp.float32, -bound2, bound2)
    return w1, b1, w2, b2


def _reference(state, w1, b1, w2, b2):
    h = jnp.maximum(state @ w1 + b1, 0.0)
    return jax.nn.softmax(h @ w2 + b2, axis=-1)


if __name__ == "__main__":
    # CartPole-like dims: state_dim=4, action_dim=2, hidden_dim=32.
    STATE_DIM, ACTION_DIM, HIDDEN_DIM = 4, 2, 32

    key = jax.random.PRNGKey(0)
    k_small, k_big, k_params = jax.random.split(key, 3)
    w1, b1, w2, b2 = init_actor_params(k_params, STATE_DIM, ACTION_DIM, HIDDEN_DIM)

    # --- Small batch (gridless path) ---
    B_small = 8
    state_small = jax.random.normal(k_small, (B_small, STATE_DIM), dtype=jnp.float32)
    probs_small = jax.block_until_ready(actor_forward(state_small, w1, b1, w2, b2))
    ref_small = _reference(state_small, w1, b1, w2, b2)
    assert probs_small.shape == (B_small, ACTION_DIM)
    assert jnp.allclose(probs_small, ref_small, atol=1e-5, rtol=1e-5)
    assert jnp.allclose(jnp.sum(probs_small, axis=-1), 1.0, atol=1e-5)

    # --- Large batch (batch-tiled path, weights VMEM-resident, parallel batch axis) ---
    B_big = 1000  # deliberately not a multiple of the tile to exercise padding
    state_big = jax.random.normal(k_big, (B_big, STATE_DIM), dtype=jnp.float32)
    probs_big = jax.block_until_ready(
        actor_forward(state_big, w1, b1, w2, b2, batch_tile=256)
    )
    ref_big = _reference(state_big, w1, b1, w2, b2)
    assert probs_big.shape == (B_big, ACTION_DIM)
    assert jnp.allclose(probs_big, ref_big, atol=1e-5, rtol=1e-5)
    assert jnp.allclose(jnp.sum(probs_big, axis=-1), 1.0, atol=1e-5)

    print("KERNEL_OK")
</pallas_src>

<mosaic_0001>
module attributes {stable_mosaic.version = 11 : i64} {
  func.func @actor_kernel(%arg0: memref<8x4xf32, #tpu.memory_space<vmem>>, %arg1: memref<4x32xf32, #tpu.memory_space<vmem>>, %arg2: memref<1x32xf32, #tpu.memory_space<vmem>>, %arg3: memref<32x2xf32, #tpu.memory_space<vmem>>, %arg4: memref<1x2xf32, #tpu.memory_space<vmem>>, %arg5: memref<8x2xf32, #tpu.memory_space<vmem>>) attributes {dimension_semantics = [], scalar_prefetch = 0 : i64, scratch_operands = 0 : i64, tpu.core_type = #tpu.core_type<tc>} {
    %c0 = arith.constant 0 : index
    %c0_0 = arith.constant 0 : index
    %0 = vector.load %arg0[%c0, %c0_0] : memref<8x4xf32, #tpu.memory_space<vmem>>, vector<8x4xf32>
    %c0_1 = arith.constant 0 : index
    %c0_2 = arith.constant 0 : index
    %1 = vector.load %arg1[%c0_1, %c0_2] : memref<4x32xf32, #tpu.memory_space<vmem>>, vector<4x32xf32>
    %cst = arith.constant dense<0.000000e+00> : vector<8x32xf32>
    %2 = tpu.matmul %0, %1, %cst {dimension_numbers = #tpu.dot_dimension_numbers<[1], [0], [0], [1], [0, 0, 1, 1], [], []>} : vector<8x4xf32>, vector<4x32xf32>, vector<8x32xf32> -> vector<8x32xf32>
    %c0_3 = arith.constant 0 : index
    %c0_4 = arith.constant 0 : index
    %3 = vector.load %arg2[%c0_3, %c0_4] : memref<1x32xf32, #tpu.memory_space<vmem>>, vector<1x32xf32>
    %4 = vector.broadcast %3 : vector<1x32xf32> to vector<8x32xf32>
    %5 = arith.addf %2, %4 : vector<8x32xf32>
    %cst_5 = arith.constant 0.000000e+00 : f32
    %6 = vector.broadcast %cst_5 : f32 to vector<8x32xf32>
    %7 = arith.maximumf %5, %6 : vector<8x32xf32>
    %c0_6 = arith.constant 0 : index
    %c0_7 = arith.constant 0 : index
    %8 = vector.load %arg3[%c0_6, %c0_7] : memref<32x2xf32, #tpu.memory_space<vmem>>, vector<32x2xf32>
    %cst_8 = arith.constant dense<0.000000e+00> : vector<8x2xf32>
    %9 = tpu.matmul %7, %8, %cst_8 {dimension_numbers = #tpu.dot_dimension_numbers<[1], [0], [0], [1], [0, 0, 1, 1], [], []>} : vector<8x32xf32>, vector<32x2xf32>, vector<8x2xf32> -> vector<8x2xf32>
    %c0_9 = arith.constant 0 : index
    %c0_10 = arith.constant 0 : index
    %10 = vector.load %arg4[%c0_9, %c0_10] : memref<1x2xf32, #tpu.memory_space<vmem>>, vector<1x2xf32>
    %11 = vector.broadcast %10 : vector<1x2xf32> to vector<8x2xf32>
    %12 = arith.addf %9, %11 : vector<8x2xf32>
    %cst_11 = arith.constant dense<0xFF800000> : vector<8xf32>
    %13 = vector.multi_reduction <maximumf>, %12, %cst_11 [1] : vector<8x2xf32> to vector<8xf32>
    %14 = vector.shape_cast %13 : vector<8xf32> to vector<8x1xf32>
    %15 = vector.broadcast %14 : vector<8x1xf32> to vector<8x2xf32>
    %16 = arith.subf %12, %15 : vector<8x2xf32>
    %17 = math.exp %16 : vector<8x2xf32>
    %cst_12 = arith.constant dense<0.000000e+00> : vector<8xf32>
    %18 = vector.multi_reduction <add>, %17, %cst_12 [1] : vector<8x2xf32> to vector<8xf32>
    %19 = vector.shape_cast %18 : vector<8xf32> to vector<8x1xf32>
    %20 = tpu.reciprocal %19 : vector<8x1xf32> -> vector<8x1xf32>
    %21 = vector.broadcast %20 : vector<8x1xf32> to vector<8x2xf32>
    %22 = arith.mulf %17, %21 : vector<8x2xf32>
    %c0_13 = arith.constant 0 : index
    %c0_14 = arith.constant 0 : index
    %23 = vector.load %arg5[%c0_13, %c0_14] : memref<8x2xf32, #tpu.memory_space<vmem>>, vector<8x2xf32>
    tpu.vector_store %arg5[%c0_13, %c0_14], %22 {strides = array<i32>} : memref<8x2xf32, #tpu.memory_space<vmem>>, vector<8x2xf32>,
    return
  }
}

</mosaic_0001>

<llo_original>
// kernel: actor_forward.1
$region0: #{actor_forward.1}
  #allocation0 [shape = 'u32[]', space=smem, size = 0x4, offset = 0x4, fixed_abs, tag = 'smem constant byte address 0x4 - core index']
  #allocation1 [shape = 'u32[144,128]{1,0:T(1,128)}', space=vmem, size = 0x12000, scoped, tag = 'internal scratch']
  %s0 = inlined_call_operand.vmem [shape: f32[8,4], index: 0, kind: input, shape index: {}]
  %s1 = inlined_call_operand.vmem [shape: f32[4,32], index: 1, kind: input, shape index: {}]
  %s2 = inlined_call_operand.vmem [shape: f32[1,32], index: 2, kind: input, shape index: {}]
  %s3 = inlined_call_operand.vmem [shape: f32[32,2], index: 3, kind: input, shape index: {}]
  %s4 = inlined_call_operand.vmem [shape: f32[1,2], index: 4, kind: input, shape index: {}]
  %s5 = inlined_call_operand.vmem [shape: f32[8,2], index: 5, kind: output, shape index: {}]
  %s6 = sld [smem:[#allocation0]]
  $region30: #{actor_forward.1} parent=0
    _
  %s8 = ssub.s32 1, %s6
  %s9 = scalar_select 0, %s8, %s6
  // Predicated region
  $region2: #{actor_forward.1} parent=0 // pred_check
    _
  $region3: #{actor_forward.1} parent=0 // pred_check_branch
    %11 = sbr.rel (0) target = $region5
  $region4: #{actor_forward.1} parent=0 // pred_region
    _
  $region5: #{actor_forward.1} parent=0 // pred_fallthru
    _
  // Predicated region
  $region6: #{actor_forward.1} parent=0 // pred_check
    _
  $region7: #{actor_forward.1} parent=0 // pred_check_branch
    %13 = sbr.rel (0) target = $region9
  $region8: #{actor_forward.1} parent=0 // pred_region
    _
  $region9: #{actor_forward.1} parent=0 // pred_fallthru
    _
  // Predicated region
  $region10: #{actor_forward.1} parent=0 // pred_check
    _
  $region11: #{actor_forward.1} parent=0 // pred_check_branch
    %15 = sbr.rel (0) target = $region13
  $region12: #{actor_forward.1} parent=0 // pred_region
    _
  $region13: #{actor_forward.1} parent=0 // pred_fallthru
    _
  // Predicated region
  $region14: #{actor_forward.1} parent=0 // pred_check
    _
  $region15: #{actor_forward.1} parent=0 // pred_check_branch
    %17 = sbr.rel (0) target = $region17
  $region16: #{actor_forward.1} parent=0 // pred_region
    _
  $region17: #{actor_forward.1} parent=0 // pred_fallthru
    _
  // Predicated region
  $region18: #{actor_forward.1} parent=0 // pred_check
    _
  $region19: #{actor_forward.1} parent=0 // pred_check_branch
    %19 = sbr.rel (0) target = $region21
  $region20: #{actor_forward.1} parent=0 // pred_region
    _
  $region21: #{actor_forward.1} parent=0 // pred_fallthru
    _
  %v20 = vld [vmem:[%s0] sm:$0xff]
  %v21 = vld [vmem:[%s1] sm:$0xf]
  %v22 = vld [vmem:[%s2] sm:$0x1]
  %v24 = vlaneseq
  %v25 = vshrl.u32 %v24, 7
  %v26 = vsub.s32 0, %v25
  %v27 = vrot.slane %v22, %v26
  %vm29 = vcmask 31744
  %v31 = vsel %vm29, %v20, 0
  %vm33 = vcmask 1043456
  %v35 = vsel %vm33, %v21, 0
  %37 = vmatprep.subr.mxu0 0.0
  %38 = vmatpush1.msra.mxu0 %v35
  %39 = vmatprep.subr.mxu0 0.0
  %40 = vmatpush1.msra.mxu0 0.0
  %41 = vmatprep.subr.mxu0 0.0
  %42 = vmatpush1.msra.mxu0 0.0
  %43 = vmatprep.subr.mxu0 0.0
  %44 = vmatpush1.msra.mxu0 0.0
  %45 = vmatprep.subr.mxu0 0.0
  %46 = vmatpush1.msra.mxu0 0.0
  %47 = vmatprep.subr.mxu0 0.0
  %48 = vmatpush1.msra.mxu0 0.0
  %49 = vmatprep.subr.mxu0 0.0
  %50 = vmatpush1.msra.mxu0 0.0
  %51 = vmatprep.subr.mxu0 0.0
  %52 = vmatpush1.msra.mxu0 0.0
  %53 = vmatprep.subr.mxu0 0.0
  %54 = vmatpush1.msra.mxu0 0.0
  %55 = vmatprep.subr.mxu0 0.0
  %56 = vmatpush1.msra.mxu0 0.0
  %57 = vmatprep.subr.mxu0 0.0
  %58 = vmatpush1.msra.mxu0 0.0
  %59 = vmatprep.subr.mxu0 0.0
  %60 = vmatpush1.msra.mxu0 0.0
  %61 = vmatprep.subr.mxu0 0.0
  %62 = vmatpush1.msra.mxu0 0.0
  %63 = vmatprep.subr.mxu0 0.0
  %64 = vmatpush1.msra.mxu0 0.0
  %65 = vmatprep.subr.mxu0 0.0
  %66 = vmatpush1.msra.mxu0 0.0
  %67 = vmatprep.subr.mxu0 0.0
  %68 = vmatpush1.msra.mxu0 0.0
  %69 = vmatprep.subr.mxu0 0.0
  %70 = vmatpush1.msra.mxu0 0.0
  %71 = vmatprep.subr.mxu0 0.0
  %72 = vmatpush1.msra.mxu0 0.0
  %73 = vmatprep.subr.mxu0 0.0
  %74 = vmatpush1.msra.mxu0 0.0
  %75 = vmatprep.subr.mxu0 0.0
  %76 = vmatpush1.msra.mxu0 0.0
  %77 = vmatprep.subr.mxu0 0.0
  %78 = vmatpush1.msra.mxu0 0.0
  %79 = vmatprep.subr.mxu0 0.0
  %80 = vmatpush1.msra.mxu0 0.0
  %81 = vmatprep.subr.mxu0 0.0
  %82 = vmatpush1.msra.mxu0 0.0
  %83 = vmatprep.subr.mxu0 0.0
  %84 = vmatpush1.msra.mxu0 0.0
  %85 = vmatprep.subr.mxu0 0.0
  %86 = vmatpush1.msra.mxu0 0.0
  %87 = vmatprep.subr.mxu0 0.0
  %88 = vmatpush1.msra.mxu0 0.0
  %89 = vmatprep.subr.mxu0 0.0
  %90 = vmatpush1.msra.mxu0 0.0
  %91 = vmatprep.subr.mxu0 0.0
  %92 = vmatpush1.msra.mxu0 0.0
  %93 = vmatprep.subr.mxu0 0.0
  %94 = vmatpush1.msra.mxu0 0.0
  %95 = vmatprep.subr.mxu0 0.0
  %96 = vmatpush1.msra.mxu0 0.0
  %97 = vmatprep.subr.mxu0 0.0
  %98 = vmatpush1.msra.mxu0 0.0
  %99 = vmatprep.subr.mxu0 0.0
  %100 = vmatpush1.msra.mxu0 0.0
  %101 = vmatprep.mubr.f32.mxu0 0.0
  %102 = vmatmul.mubr.f32.gmra.mrb[0].mxu0 %v31
  %v103 = vpop.f32.mrb[0].mxu0
  %v104 = vadd.f32 %v27, %v103
  %v105 = vpop.f32.mrb[0].mxu0
  %106 = vdwg.mxu0
  %v107 = vmax.f32 %v104, 0.0
  %v108 = vld [vmem:[%s3] sm:$0xff]
  %v109 = vld [vmem:[%s3 + $0x8] sm:$0xff]
  %v110 = vld [vmem:[%s3 + $0x10] sm:$0xff]
  %v111 = vld [vmem:[%s3 + $0x18] sm:$0xff]
  %v112 = vld [vmem:[%s4] sm:$0x1]
  %v114 = vlaneseq
  %v115 = vshrl.u32 %v114, 7
  %v116 = vsub.s32 0, %v115
  %v117 = vrot.slane %v112, %v116
  %vm119 = vcmask 261120
  %v121 = vsel %vm119, %v107, 0
  %123 = vmatprep.subr.mxu0 0.0
  %124 = vmatpush1.msra.mxu0 %v108
  %125 = vmatprep.subr.mxu0 0.0
  %126 = vmatpush1.msra.mxu0 %v109
  %127 = vmatprep.subr.mxu0 0.0
  %128 = vmatpush1.msra.mxu0 %v110
  %129 = vmatprep.subr.mxu0 0.0
  %130 = vmatpush1.msra.mxu0 %v111
  %131 = vmatprep.subr.mxu0 0.0
  %132 = vmatpush1.msra.mxu0 0.0
  %133 = vmatprep.subr.mxu0 0.0
  %134 = vmatpush1.msra.mxu0 0.0
  %135 = vmatprep.subr.mxu0 0.0
  %136 = vmatpush1.msra.mxu0 0.0
  %137 = vmatprep.subr.mxu0 0.0
  %138 = vmatpush1.msra.mxu0 0.0
  %139 = vmatprep.subr.mxu0 0.0
  %140 = vmatpush1.msra.mxu0 0.0
  %141 = vmatprep.subr.mxu0 0.0
  %142 = vmatpush1.msra.mxu0 0.0
  %143 = vmatprep.subr.mxu0 0.0
  %144 = vmatpush1.msra.mxu0 0.0
  %145 = vmatprep.subr.mxu0 0.0
  %146 = vmatpush1.msra.mxu0 0.0
  %147 = vmatprep.subr.mxu0 0.0
  %148 = vmatpush1.msra.mxu0 0.0
  %149 = vmatprep.subr.mxu0 0.0
  %150 = vmatpush1.msra.mxu0 0.0
  %151 = vmatprep.subr.mxu0 0.0
  %152 = vmatpush1.msra.mxu0 0.0
  %153 = vmatprep.subr.mxu0 0.0
  %154 = vmatpush1.msra.mxu0 0.0
  %155 = vmatprep.subr.mxu0 0.0
  %156 = vmatpush1.msra.mxu0 0.0
  %157 = vmatprep.subr.mxu0 0.0
  %158 = vmatpush1.msra.mxu0 0.0
  %159 = vmatprep.subr.mxu0 0.0
  %160 = vmatpush1.msra.mxu0 0.0
  %161 = vmatprep.subr.mxu0 0.0
  %162 = vmatpush1.msra.mxu0 0.0
  %163 = vmatprep.subr.mxu0 0.0
  %164 = vmatpush1.msra.mxu0 0.0
  %165 = vmatprep.subr.mxu0 0.0
  %166 = vmatpush1.msra.mxu0 0.0
  %167 = vmatprep.subr.mxu0 0.0
  %168 = vmatpush1.msra.mxu0 0.0
  %169 = vmatprep.subr.mxu0 0.0
  %170 = vmatpush1.msra.mxu0 0.0
  %171 = vmatprep.subr.mxu0 0.0
  %172 = vmatpush1.msra.mxu0 0.0
  %173 = vmatprep.subr.mxu0 0.0
  %174 = vmatpush1.msra.mxu0 0.0
  %175 = vmatprep.subr.mxu0 0.0
  %176 = vmatpush1.msra.mxu0 0.0
  %177 = vmatprep.subr.mxu0 0.0
  %178 = vmatpush1.msra.mxu0 0.0
  %179 = vmatprep.subr.mxu0 0.0
  %180 = vmatpush1.msra.mxu0 0.0
  %181 = vmatprep.subr.mxu0 0.0
  %182 = vmatpush1.msra.mxu0 0.0
  %183 = vmatprep.subr.mxu0 0.0
  %184 = vmatpush1.msra.mxu0 0.0
  %185 = vmatprep.subr.mxu0 0.0
  %186 = vmatpush1.msra.mxu0 0.0
  %187 = vmatprep.mubr.f32.mxu0 0.0
  %188 = vmatmul.mubr.f32.gmra.mrb[0].mxu0 %v121
  %v189 = vpop.f32.mrb[0].mxu0
  %v190 = vadd.f32 %v117, %v189
  %v191 = vpop.f32.mrb[0].mxu0
  %192 = vdwg.mxu0
  %vm193 = vcmask 15360
  %v194 = vsel %vm193, %v190, -inf
  %195 = vmax.xlane.f32.xlu0 %v194
  %v196 = vpop.xlane.xlu0 %195
  %v197 = vsub.f32 %v190, %v196
  %v198 = vmul.f32 %v197, 1.442695
  %v199 = vpow.pop %v198
  %v200 = vsel %vm193, %v199, 0.0
  %201 = vadd.xlane.f32.xlu0 %v200
  %v202 = vpop.xlane.xlu0 %201
  %v203 = vrcp.pop %v202
  %v204 = vmul.f32 %v199, %v203
  %205 = vst.msk [vmem:[%s5] sm:$0xff] %vm193, %v204
  // Predicated region
  $region22: #{actor_forward.1} parent=0 // pred_check
    _
  $region23: #{actor_forward.1} parent=0 // pred_check_branch
    %207 = sbr.rel (0) target = $region25
  $region24: #{actor_forward.1} parent=0 // pred_region
    _
  $region25: #{actor_forward.1} parent=0 // pred_fallthru
    _
  // Predicated region
  $region26: #{actor_forward.1} parent=0 // pred_check
    _
  $region27: #{actor_forward.1} parent=0 // pred_check_branch
    %209 = sbr.rel (0) target = $region29
  $region28: #{actor_forward.1} parent=0 // pred_region
    _
  $region29: #{actor_forward.1} parent=0 // pred_fallthru
    _

</llo_original>
